<compile_context>
chip_gen: v5e
topology: v5e:2x2
jax: 0.10.0
libtpu: 0.0.40
codegen_flags: <defaults>
</compile_context>

<pallas_src>
import math

import jax
import jax.numpy as jnp
from jax.experimental import pallas as pl
from jax.experimental.pallas import tpu as pltpu


# ----------------------------------------------------------------------------
# Per-chip VMEM budget / tile preferences
# ----------------------------------------------------------------------------
def _vmem_limit_bytes():
    # Feedback: stay <= ~48 MiB on v7x (64 MiB physical VMEM), raise to ~96 MiB
    # on v5e/v6e (128 MiB).  Fall back to a conservative 32 MiB if the query
    # is unavailable.
    try:
        cap = int(pltpu.get_tpu_info().vmem_capacity_bytes)
        return max(32 * 1024 * 1024, min(cap * 3 // 4, 96 * 1024 * 1024))
    except Exception:
        return 32 * 1024 * 1024


_VMEM_LIMIT = _vmem_limit_bytes()
_BIG_VMEM = _VMEM_LIMIT >= 64 * 1024 * 1024
_TM_PREF = 512 if _BIG_VMEM else 256     # projection / dense row tile
_TQ_PREF = 256 if _BIG_VMEM else 128     # attention q-row tile


def _seq_tile(n, preferred):
    """Largest multiple-of-8 divisor of n that is <= preferred, else n itself.

    Always returns either a multiple of 8 (satisfies the (8, 128) block
    constraint on the sublane axis) or the full dimension; never a silent
    "almost divisor".  Returning the full dimension for awkward n is
    functionally safe (single large block).
    # TODO(synk): pl.cdiv-based grid with a padded/masked tail tile for very
    # long, non-divisible sequence lengths.
    """
    if n <= preferred:
        return n
    t = (preferred // 8) * 8
    while t >= 8:
        if n % t == 0:
            return t
        t -= 8
    return n


# ----------------------------------------------------------------------------
# QKV projections (M-tiled, weights resident via constant block index)
# ----------------------------------------------------------------------------
def _qkv_proj_kernel(q_ref, k_ref, v_ref, wq_ref, wk_ref, wv_ref,
                     bq_ref, bk_ref, bv_ref, qo_ref, ko_ref, vo_ref):
    q = q_ref[...].astype(jnp.bfloat16)
    k = k_ref[...].astype(jnp.bfloat16)
    v = v_ref[...].astype(jnp.bfloat16)
    qo_ref[...] = (jnp.dot(q, wq_ref[...], preferred_element_type=jnp.float32)
                   + bq_ref[...]).astype(qo_ref.dtype)
    ko_ref[...] = (jnp.dot(k, wk_ref[...], preferred_element_type=jnp.float32)
                   + bk_ref[...]).astype(ko_ref.dtype)
    vo_ref[...] = (jnp.dot(v, wv_ref[...], preferred_element_type=jnp.float32)
                   + bv_ref[...]).astype(vo_ref.dtype)


def _self_qkv_proj_kernel(x_ref, wq_ref, wk_ref, wv_ref,
                          bq_ref, bk_ref, bv_ref, qo_ref, ko_ref, vo_ref):
    # Self-attention fast path: activation tile is DMA'd and loaded once,
    # reused for all three projections (3x -> 1x activation read traffic).
    x = x_ref[...].astype(jnp.bfloat16)
    qo_ref[...] = (jnp.dot(x, wq_ref[...], preferred_element_type=jnp.float32)
                   + bq_ref[...]).astype(qo_ref.dtype)
    ko_ref[...] = (jnp.dot(x, wk_ref[...], preferred_element_type=jnp.float32)
                   + bk_ref[...]).astype(ko_ref.dtype)
    vo_ref[...] = (jnp.dot(x, wv_ref[...], preferred_element_type=jnp.float32)
                   + bv_ref[...]).astype(vo_ref.dtype)


def _linear_kernel(x_ref, w_ref, b_ref, o_ref):
    x = x_ref[...].astype(jnp.bfloat16)
    y = jnp.dot(x, w_ref[...], preferred_element_type=jnp.float32) + b_ref[...]
    o_ref[...] = y.astype(o_ref.dtype)


def _proj_compiler_params():
    return pltpu.CompilerParams(
        dimension_semantics=("parallel",),
        vmem_limit_bytes=_VMEM_LIMIT,
    )


def pallas_qkv_proj(q2, k2, v2, wq, wk, wv, bq, bk, bv):
    """q2/k2/v2: (M, K) f32; w*: (K, N) bf16; b*: (N,) f32 -> three (M, N) bf16."""
    M, K = q2.shape
    N = wq.shape[1]
    tm = _seq_tile(M, _TM_PREF)
    xspec = pl.BlockSpec((tm, K), lambda i: (i, 0))
    # Constant block index -> weights/bias DMA'd once, resident across M tiles.
    # TODO(synk): pipeline_mode=pl.Buffered(1) on these resident specs would
    # also halve their VMEM (no double buffer); tile N/K once 3*d_model^2*2B
    # no longer fits the budget (d_model ~>= 1.5-2K on v7x).
    wspec = pl.BlockSpec((K, N), lambda i: (0, 0))
    bspec = pl.BlockSpec((1, N), lambda i: (0, 0))
    ospec = pl.BlockSpec((tm, N), lambda i: (i, 0))
    out_sd = jax.ShapeDtypeStruct((M, N), jnp.bfloat16)
    return pl.pallas_call(
        _qkv_proj_kernel,
        out_shape=(out_sd, out_sd, out_sd),
        grid_spec=pltpu.PrefetchScalarGridSpec(
            num_scalar_prefetch=0,
            grid=(M // tm,),
            in_specs=[xspec, xspec, xspec, wspec, wspec, wspec,
                      bspec, bspec, bspec],
            out_specs=[ospec, ospec, ospec],
        ),
        compiler_params=_proj_compiler_params(),
    )(q2, k2, v2, wq, wk, wv,
      bq.reshape(1, N), bk.reshape(1, N), bv.reshape(1, N))


def pallas_self_qkv_proj(x2, wq, wk, wv, bq, bk, bv):
    """Self-attention fast path: x2: (M, K) f32 -> three (M, N) bf16."""
    M, K = x2.shape
    N = wq.shape[1]
    tm = _seq_tile(M, _TM_PREF)
    xspec = pl.BlockSpec((tm, K), lambda i: (i, 0))
    wspec = pl.BlockSpec((K, N), lambda i: (0, 0))
    bspec = pl.BlockSpec((1, N), lambda i: (0, 0))
    ospec = pl.BlockSpec((tm, N), lambda i: (i, 0))
    out_sd = jax.ShapeDtypeStruct((M, N), jnp.bfloat16)
    return pl.pallas_call(
        _self_qkv_proj_kernel,
        out_shape=(out_sd, out_sd, out_sd),
        grid_spec=pltpu.PrefetchScalarGridSpec(
            num_scalar_prefetch=0,
            grid=(M // tm,),
            in_specs=[xspec, wspec, wspec, wspec, bspec, bspec, bspec],
            out_specs=[ospec, ospec, ospec],
        ),
        compiler_params=_proj_compiler_params(),
    )(x2, wq, wk, wv, bq.reshape(1, N), bk.reshape(1, N), bv.reshape(1, N))


def pallas_linear(x, w_bf16, b, *, out_dtype=jnp.bfloat16):
    """y = x @ W + b, M-tiled, weight resident (DMA'd exactly once)."""
    M, K = x.shape
    N = w_bf16.shape[1]
    tm = _seq_tile(M, _TM_PREF)
    return pl.pallas_call(
        _linear_kernel,
        out_shape=jax.ShapeDtypeStruct((M, N), out_dtype),
        grid_spec=pltpu.PrefetchScalarGridSpec(
            num_scalar_prefetch=0,
            grid=(M // tm,),
            in_specs=[
                pl.BlockSpec((tm, K), lambda i: (i, 0)),
                pl.BlockSpec((K, N), lambda i: (0, 0)),   # resident weight
                pl.BlockSpec((1, N), lambda i: (0, 0)),
            ],
            out_specs=pl.BlockSpec((tm, N), lambda i: (i, 0)),
        ),
        compiler_params=_proj_compiler_params(),
    )(x, w_bf16, b.reshape(1, N))


# ----------------------------------------------------------------------------
# Attention.  q is pre-scaled by 1/sqrt(depth) (folded into wq).  The mask is
# the RAW PyTorch mask; the *(-1e9) add happens in-kernel on the logits tile.
# The per-batch (Sq, Sk) mask is resident (constant block index over h, i).
# ----------------------------------------------------------------------------
def _make_attention_kernel(tq, has_mask, bhsd_layout):
    def kernel(*refs):
        if has_mask:
            q_ref, k_ref, v_ref, mask_ref, o_ref, w_ref = refs
        else:
            q_ref, k_ref, v_ref, o_ref, w_ref = refs

        if bhsd_layout:
            q = q_ref[0, 0]          # (tq, D) bf16
            k = k_ref[0, 0]          # (Sk, D) bf16
            v = v_ref[0, 0]
        else:
            q = q_ref[...]           # (tq, D) bf16 (head columns of (B*Sq, d_model))
            k = k_ref[...]           # (Sk, D) bf16
            v = v_ref[...]

        logits = jax.lax.dot_general(
            q, k,
            dimension_numbers=(((1,), (1,)), ((), ())),   # q @ k^T
            preferred_element_type=jnp.float32,
        )

        if has_mask:
            qi = pl.program_id(2)
            if tq % 8 == 0:
                start = pl.multiple_of(qi * tq, 8)
            else:
                start = qi * tq
            # In-kernel masked add (VPU), mask resident per batch.
            logits = logits + mask_ref[0, pl.ds(start, tq), :] * jnp.float32(-1e9)

        m = jnp.max(logits, axis=-1, keepdims=True)
        unnorm = jnp.exp(logits - m)                      # f32 EUP exp
        denom = jnp.sum(unnorm, axis=-1, keepdims=True)
        weights = unnorm * pl.reciprocal(denom, approx=True)   # EUP reciprocal

        out = jnp.dot(weights.astype(v.dtype), v, preferred_element_type=jnp.float32)

        if bhsd_layout:
            o_ref[0, 0] = out.astype(o_ref.dtype)
        else:
            o_ref[...] = out.astype(o_ref.dtype)
        w_ref[0, 0] = weights
    return kernel


def _attn_compiler_params():
    return pltpu.CompilerParams(
        dimension_semantics=("parallel", "parallel", "parallel"),
        vmem_limit_bytes=_VMEM_LIMIT,
    )


def pallas_attention_headcols(q_p, k_p, v_p, mask3, B, H, Sq, Sk, D, tq):
    """Transpose-free path: q_p (B*Sq, H*D), k_p/v_p (B*Sk, H*D) bf16.

    Returns (context (B*Sq, H*D) bf16 already in concat-heads layout,
             attention_weights (B, H, Sq, Sk) f32)."""
    nQ = Sq // tq
    d_model = H * D
    has_mask = mask3 is not None
    kernel = _make_attention_kernel(tq, has_mask, bhsd_layout=False)

    in_specs = [
        pl.BlockSpec((tq, D), lambda b, h, i: (b * nQ + i, h)),   # q head cols
        pl.BlockSpec((Sk, D), lambda b, h, i: (b, h)),            # k head cols
        pl.BlockSpec((Sk, D), lambda b, h, i: (b, h)),            # v head cols
    ]
    args = [q_p, k_p, v_p]
    if has_mask:
        # Resident per batch: block index constant over (h, i) -> DMA'd once/batch.
        # TODO(synk): for very long Sq*Sk switch to a per-tile mask block.
        in_specs.append(pl.BlockSpec((1, Sq, Sk), lambda b, h, i: (b, 0, 0)))
        args.append(mask3)

    out_shape = (
        jax.ShapeDtypeStruct((B * Sq, d_model), jnp.bfloat16),
        jax.ShapeDtypeStruct((B, H, Sq, Sk), jnp.float32),
    )
    out_specs = [
        pl.BlockSpec((tq, D), lambda b, h, i: (b * nQ + i, h)),
        pl.BlockSpec((1, 1, tq, Sk), lambda b, h, i: (b, h, i, 0)),
    ]
    return pl.pallas_call(
        kernel,
        out_shape=out_shape,
        grid_spec=pltpu.PrefetchScalarGridSpec(
            num_scalar_prefetch=0,
            grid=(B, H, nQ),
            in_specs=in_specs,
            out_specs=out_specs,
        ),
        compiler_params=_attn_compiler_params(),
    )(*args)


def pallas_attention_bhsd(qh, kh, vh, mask3, tq):
    """Fallback path (depth not a multiple of 128): (B, H, S, D) layout."""
    B, H, Sq, D = qh.shape
    Sk = kh.shape[2]
    nQ = Sq // tq
    has_mask = mask3 is not None
    kernel = _make_attention_kernel(tq, has_mask, bhsd_layout=True)

    in_specs = [
        pl.BlockSpec((1, 1, tq, D), lambda b, h, i: (b, h, i, 0)),
        pl.BlockSpec((1, 1, Sk, D), lambda b, h, i: (b, h, 0, 0)),
        pl.BlockSpec((1, 1, Sk, D), lambda b, h, i: (b, h, 0, 0)),
    ]
    args = [qh, kh, vh]
    if has_mask:
        in_specs.append(pl.BlockSpec((1, Sq, Sk), lambda b, h, i: (b, 0, 0)))
        args.append(mask3)

    out_shape = (
        jax.ShapeDtypeStruct((B, H, Sq, D), jnp.bfloat16),
        jax.ShapeDtypeStruct((B, H, Sq, Sk), jnp.float32),
    )
    out_specs = [
        pl.BlockSpec((1, 1, tq, D), lambda b, h, i: (b, h, i, 0)),
        pl.BlockSpec((1, 1, tq, Sk), lambda b, h, i: (b, h, i, 0)),
    ]
    return pl.pallas_call(
        kernel,
        out_shape=out_shape,
        grid_spec=pltpu.PrefetchScalarGridSpec(
            num_scalar_prefetch=0,
            grid=(B, H, nQ),
            in_specs=in_specs,
            out_specs=out_specs,
        ),
        compiler_params=_attn_compiler_params(),
    )(*args)


# ----------------------------------------------------------------------------
# MultiHeadAttention module (parameters + forward)
# ----------------------------------------------------------------------------
class MultiHeadAttentionPallas:
    def __init__(self, d_model, num_heads, key):
        assert d_model % num_heads == 0
        self.d_model = d_model
        self.num_heads = num_heads
        self.depth = d_model // num_heads

        keys = jax.random.split(key, 8)
        scale = 0.02

        def init_linear(kw, kb):
            w = scale * jax.random.normal(kw, (d_model, d_model), dtype=jnp.float32)
            b = scale * jax.random.normal(kb, (d_model,), dtype=jnp.float32)
            return w, b

        # f32 master weights, stored as (in, out): y = x @ W + b
        self.wq_w, self.wq_b = init_linear(keys[0], keys[1])
        self.wk_w, self.wk_b = init_linear(keys[2], keys[3])
        self.wv_w, self.wv_b = init_linear(keys[4], keys[5])
        self.dense_w, self.dense_b = init_linear(keys[6], keys[7])

        # bf16 copies for the MXU; fold 1/sqrt(depth) into the q projection so
        # the attention kernel never scales the (S, S) logits.
        inv_sqrt_d = 1.0 / math.sqrt(self.depth)
        self.wq_w_bf = (self.wq_w * inv_sqrt_d).astype(jnp.bfloat16)
        self.wq_b_s = self.wq_b * inv_sqrt_d          # bias stays f32
        self.wk_w_bf = self.wk_w.astype(jnp.bfloat16)
        self.wv_w_bf = self.wv_w.astype(jnp.bfloat16)
        self.dense_w_bf = self.dense_w.astype(jnp.bfloat16)

    def split_heads(self, x, batch_size):
        # (B, S, d_model) -> (B, H, S, depth)   (fallback path only)
        x = x.reshape(batch_size, -1, self.num_heads, self.depth)
        return jnp.transpose(x, (0, 2, 1, 3))

    def _prep_mask(self, mask, B, Sq, Sk):
        if mask is None:
            return None
        m = mask.astype(jnp.float32)
        m = m.reshape(B, *m.shape[-2:])        # drop the broadcast head axis
        if m.shape != (B, Sq, Sk):
            m = jnp.broadcast_to(m, (B, Sq, Sk))
        return m

    def __call__(self, v, k, q, mask):
        B, Sq, d = q.shape
        Sk = k.shape[1]
        H, D = self.num_heads, self.depth

        q2 = q.reshape(-1, d)
        k2 = k.reshape(-1, d)
        v2 = v.reshape(-1, d)

        # --- Q/K/V projections ------------------------------------------------
        if (q is k) and (k is v):
            # Self-attention fast path: read the activation once.
            q_p, k_p, v_p = pallas_self_qkv_proj(
                q2, self.wq_w_bf, self.wk_w_bf, self.wv_w_bf,
                self.wq_b_s, self.wk_b, self.wv_b)
        elif Sq == Sk:
            q_p, k_p, v_p = pallas_qkv_proj(
                q2, k2, v2,
                self.wq_w_bf, self.wk_w_bf, self.wv_w_bf,
                self.wq_b_s, self.wk_b, self.wv_b)
        else:
            q_p = pallas_linear(q2, self.wq_w_bf, self.wq_b_s)
            k_p = pallas_linear(k2, self.wk_w_bf, self.wk_b)
            v_p = pallas_linear(v2, self.wv_w_bf, self.wv_b)

        mask3 = self._prep_mask(mask, B, Sq, Sk)

        # --- attention --------------------------------------------------------
        tq = _seq_tile(Sq, _TQ_PREF)
        use_headcols = (D % 128 == 0) and (Sk % 8 == 0) and (tq % 8 == 0)

        if use_headcols:
            # Transpose-free path: head columns read straight from the 2-D
            # projections; context written directly in concat-heads layout.
            ctx2d, attention_weights = pallas_attention_headcols(
                q_p, k_p, v_p, mask3, B, H, Sq, Sk, D, tq)
        else:
            # Fallback: explicit (cheap bf16) wrapper transposes.
            qh = self.split_heads(q_p.reshape(B, Sq, d), B)
            kh = self.split_heads(k_p.reshape(B, Sk, d), B)
            vh = self.split_heads(v_p.reshape(B, Sk, d), B)
            ctx_bhsd, attention_weights = pallas_attention_bhsd(qh, kh, vh, mask3, tq)
            ctx2d = jnp.transpose(ctx_bhsd, (0, 2, 1, 3)).reshape(B * Sq, d)

        # --- final dense: single GEMM, resident (d_model, d_model) weight ------
        out2d = pallas_linear(ctx2d, self.dense_w_bf, self.dense_b,
                              out_dtype=jnp.float32)
        output = out2d.reshape(B, Sq, d)
        return output, attention_weights


# ----------------------------------------------------------------------------
# Pure-JAX f32 reference (for correctness check)
# ----------------------------------------------------------------------------
def reference_forward(mha, v, k, q, mask):
    B, Sq, _ = q.shape
    q_p = q @ mha.wq_w + mha.wq_b
    k_p = k @ mha.wk_w + mha.wk_b
    v_p = v @ mha.wv_w + mha.wv_b
    qh = mha.split_heads(q_p, B)
    kh = mha.split_heads(k_p, B)
    vh = mha.split_heads(v_p, B)
    logits = jnp.einsum("bhqd,bhkd->bhqk", qh, kh) / math.sqrt(mha.depth)
    if mask is not None:
        logits = logits + mask * (-1e9)
    weights = jax.nn.softmax(logits, axis=-1)
    out = jnp.einsum("bhqk,bhkd->bhqd", weights, vh)
    concat = jnp.transpose(out, (0, 2, 1, 3)).reshape(B, Sq, mha.d_model)
    output = concat @ mha.dense_w + mha.dense_b
    return output, weights


# ----------------------------------------------------------------------------
# Self-test
# ----------------------------------------------------------------------------
if __name__ == "__main__":
    master_key = jax.random.PRNGKey(0)

    def run_case(d_model, num_heads, batch, seq, self_attn, use_mask, key):
        kp, kq, kk, kv, km = jax.random.split(key, 5)
        mha = MultiHeadAttentionPallas(d_model, num_heads, kp)
        q = jax.random.normal(kq, (batch, seq, d_model), dtype=jnp.float32)
        if self_attn:
            k = q
            v = q
        else:
            k = jax.random.normal(kk, (batch, seq, d_model), dtype=jnp.float32)
            v = jax.random.normal(kv, (batch, seq, d_model), dtype=jnp.float32)
        mask = None
        if use_mask:
            # 1.0 where attention is disallowed, 0.0 otherwise (PyTorch convention).
            mask = (jax.random.uniform(km, (batch, 1, seq, seq)) > 0.8).astype(jnp.float32)

        out, w = mha(v, k, q, mask)
        out = jax.block_until_ready(out)
        w = jax.block_until_ready(w)

        ref_out, ref_w = reference_forward(mha, v, k, q, mask)
        assert out.shape == (batch, seq, d_model)
        assert w.shape == (batch, num_heads, seq, seq)
        # bf16 MXU inputs (f32 accumulate) + approx reciprocal -> loosened tol.
        assert jnp.allclose(out, ref_out, atol=1e-2, rtol=1e-2), (d_model, num_heads)
        assert jnp.allclose(w, ref_w, atol=1e-2, rtol=1e-2), (d_model, num_heads)

    keys = jax.random.split(master_key, 3)
    # depth = 128 -> transpose-free head-column path + self-attention fast path.
    run_case(256, 2, 2, 8, self_attn=True, use_mask=True, key=keys[0])
    # depth = 8   -> fallback per-head-layout path + fused 3-input projection.
    run_case(32, 4, 2, 8, self_attn=False, use_mask=True, key=keys[1])
    # mask=None handling.
    run_case(32, 4, 2, 8, self_attn=False, use_mask=False, key=keys[2])

    print("KERNEL_OK")
</pallas_src>

<mosaic_0001>
module attributes {stable_mosaic.version = 11 : i64} {
  func.func @_self_qkv_proj_kernel(%arg0: i32, %arg1: memref<16x256xf32, #tpu.memory_space<vmem>>, %arg2: memref<256x256xbf16, #tpu.memory_space<vmem>>, %arg3: memref<256x256xbf16, #tpu.memory_space<vmem>>, %arg4: memref<256x256xbf16, #tpu.memory_space<vmem>>, %arg5: memref<1x256xf32, #tpu.memory_space<vmem>>, %arg6: memref<1x256xf32, #tpu.memory_space<vmem>>, %arg7: memref<1x256xf32, #tpu.memory_space<vmem>>, %arg8: memref<16x256xbf16, #tpu.memory_space<vmem>>, %arg9: memref<16x256xbf16, #tpu.memory_space<vmem>>, %arg10: memref<16x256xbf16, #tpu.memory_space<vmem>>) attributes {dimension_semantics = [#tpu.dimension_semantics<parallel>], iteration_bounds = array<i64: 1>, scalar_prefetch = 0 : i64, scratch_operands = 0 : i64, tpu.core_type = #tpu.core_type<tc>, window_params = [{transform_indices = @transform_0, window_bounds = array<i64: 16, 256>}, {pipeline_mode = #tpu.pipeline_mode<synchronous>, transform_indices = @transform_1, window_bounds = array<i64: 256, 256>}, {pipeline_mode = #tpu.pipeline_mode<synchronous>, transform_indices = @transform_2, window_bounds = array<i64: 256, 256>}, {pipeline_mode = #tpu.pipeline_mode<synchronous>, transform_indices = @transform_3, window_bounds = array<i64: 256, 256>}, {pipeline_mode = #tpu.pipeline_mode<synchronous>, transform_indices = @transform_4, window_bounds = array<i64: 1, 256>}, {pipeline_mode = #tpu.pipeline_mode<synchronous>, transform_indices = @transform_5, window_bounds = array<i64: 1, 256>}, {pipeline_mode = #tpu.pipeline_mode<synchronous>, transform_indices = @transform_6, window_bounds = array<i64: 1, 256>}, {transform_indices = @transform_7, window_bounds = array<i64: 16, 256>}, {transform_indices = @transform_8, window_bounds = array<i64: 16, 256>}, {transform_indices = @transform_9, window_bounds = array<i64: 16, 256>}]} {
    %c0 = arith.constant 0 : index
    %c0_0 = arith.constant 0 : index
    %0 = vector.load %arg1[%c0, %c0_0] : memref<16x256xf32, #tpu.memory_space<vmem>>, vector<16x256xf32>
    %1 = arith.truncf %0 : vector<16x256xf32> to vector<16x256xbf16>
    %c0_1 = arith.constant 0 : index
    %c0_2 = arith.constant 0 : index
    %2 = vector.load %arg2[%c0_1, %c0_2] : memref<256x256xbf16, #tpu.memory_space<vmem>>, vector<256x256xbf16>
    %cst = arith.constant dense<0.000000e+00> : vector<16x256xf32>
    %3 = tpu.matmul %1, %2, %cst {dimension_numbers = #tpu.dot_dimension_numbers<[1], [0], [0], [1], [0, 0, 1, 1], [], []>} : vector<16x256xbf16>, vector<256x256xbf16>, vector<16x256xf32> -> vector<16x256xf32>
    %c0_3 = arith.constant 0 : index
    %c0_4 = arith.constant 0 : index
    %4 = vector.load %arg5[%c0_3, %c0_4] : memref<1x256xf32, #tpu.memory_space<vmem>>, vector<1x256xf32>
    %5 = vector.broadcast %4 : vector<1x256xf32> to vector<16x256xf32>
    %6 = arith.addf %3, %5 : vector<16x256xf32>
    %7 = arith.truncf %6 : vector<16x256xf32> to vector<16x256xbf16>
    %c0_5 = arith.constant 0 : index
    %c0_6 = arith.constant 0 : index
    %8 = vector.load %arg8[%c0_5, %c0_6] : memref<16x256xbf16, #tpu.memory_space<vmem>>, vector<16x256xbf16>
    tpu.vector_store %arg8[%c0_5, %c0_6], %7 {strides = array<i32>} : memref<16x256xbf16, #tpu.memory_space<vmem>>, vector<16x256xbf16>,
    %c0_7 = arith.constant 0 : index
    %c0_8 = arith.constant 0 : index
    %9 = vector.load %arg3[%c0_7, %c0_8] : memref<256x256xbf16, #tpu.memory_space<vmem>>, vector<256x256xbf16>
    %cst_9 = arith.constant dense<0.000000e+00> : vector<16x256xf32>
    %10 = tpu.matmul %1, %9, %cst_9 {dimension_numbers = #tpu.dot_dimension_numbers<[1], [0], [0], [1], [0, 0, 1, 1], [], []>} : vector<16x256xbf16>, vector<256x256xbf16>, vector<16x256xf32> -> vector<16x256xf32>
    %c0_10 = arith.constant 0 : index
    %c0_11 = arith.constant 0 : index
    %11 = vector.load %arg6[%c0_10, %c0_11] : memref<1x256xf32, #tpu.memory_space<vmem>>, vector<1x256xf32>
    %12 = vector.broadcast %11 : vector<1x256xf32> to vector<16x256xf32>
    %13 = arith.addf %10, %12 : vector<16x256xf32>
    %14 = arith.truncf %13 : vector<16x256xf32> to vector<16x256xbf16>
    %c0_12 = arith.constant 0 : index
    %c0_13 = arith.constant 0 : index
    %15 = vector.load %arg9[%c0_12, %c0_13] : memref<16x256xbf16, #tpu.memory_space<vmem>>, vector<16x256xbf16>
    tpu.vector_store %arg9[%c0_12, %c0_13], %14 {strides = array<i32>} : memref<16x256xbf16, #tpu.memory_space<vmem>>, vector<16x256xbf16>,
    %c0_14 = arith.constant 0 : index
    %c0_15 = arith.constant 0 : index
    %16 = vector.load %arg4[%c0_14, %c0_15] : memref<256x256xbf16, #tpu.memory_space<vmem>>, vector<256x256xbf16>
    %cst_16 = arith.constant dense<0.000000e+00> : vector<16x256xf32>
    %17 = tpu.matmul %1, %16, %cst_16 {dimension_numbers = #tpu.dot_dimension_numbers<[1], [0], [0], [1], [0, 0, 1, 1], [], []>} : vector<16x256xbf16>, vector<256x256xbf16>, vector<16x256xf32> -> vector<16x256xf32>
    %c0_17 = arith.constant 0 : index
    %c0_18 = arith.constant 0 : index
    %18 = vector.load %arg7[%c0_17, %c0_18] : memref<1x256xf32, #tpu.memory_space<vmem>>, vector<1x256xf32>
    %19 = vector.broadcast %18 : vector<1x256xf32> to vector<16x256xf32>
    %20 = arith.addf %17, %19 : vector<16x256xf32>
    %21 = arith.truncf %20 : vector<16x256xf32> to vector<16x256xbf16>
    %c0_19 = arith.constant 0 : index
    %c0_20 = arith.constant 0 : index
    %22 = vector.load %arg10[%c0_19, %c0_20] : memref<16x256xbf16, #tpu.memory_space<vmem>>, vector<16x256xbf16>
    tpu.vector_store %arg10[%c0_19, %c0_20], %21 {strides = array<i32>} : memref<16x256xbf16, #tpu.memory_space<vmem>>, vector<16x256xbf16>,
    return
  }
  func.func @transform_0(%arg0: i32) -> (i32, i32) {
    %c0_i32 = arith.constant 0 : i32
    %c0_i32_0 = arith.constant 0 : i32
    return %arg0, %c0_i32 : i32, i32
  }
  func.func @transform_1(%arg0: i32) -> (i32, i32) {
    %c0_i32 = arith.constant 0 : i32
    %c0_i32_0 = arith.constant 0 : i32
    %c0_i32_1 = arith.constant 0 : i32
    return %c0_i32, %c0_i32_0 : i32, i32
  }
  func.func @transform_2(%arg0: i32) -> (i32, i32) {
    %c0_i32 = arith.constant 0 : i32
    %c0_i32_0 = arith.constant 0 : i32
    %c0_i32_1 = arith.constant 0 : i32
    return %c0_i32, %c0_i32_0 : i32, i32
  }
  func.func @transform_3(%arg0: i32) -> (i32, i32) {
    %c0_i32 = arith.constant 0 : i32
    %c0_i32_0 = arith.constant 0 : i32
    %c0_i32_1 = arith.constant 0 : i32
    return %c0_i32, %c0_i32_0 : i32, i32
  }
  func.func @transform_4(%arg0: i32) -> (i32, i32) {
    %c0_i32 = arith.constant 0 : i32
    %c0_i32_0 = arith.constant 0 : i32
    %c0_i32_1 = arith.constant 0 : i32
    return %c0_i32, %c0_i32_0 : i32, i32
  }
  func.func @transform_5(%arg0: i32) -> (i32, i32) {
    %c0_i32 = arith.constant 0 : i32
    %c0_i32_0 = arith.constant 0 : i32
    %c0_i32_1 = arith.constant 0 : i32
    return %c0_i32, %c0_i32_0 : i32, i32
  }
  func.func @transform_6(%arg0: i32) -> (i32, i32) {
    %c0_i32 = arith.constant 0 : i32
    %c0_i32_0 = arith.constant 0 : i32
    %c0_i32_1 = arith.constant 0 : i32
    return %c0_i32, %c0_i32_0 : i32, i32
  }
  func.func @transform_7(%arg0: i32) -> (i32, i32) {
    %c0_i32 = arith.constant 0 : i32
    %c0_i32_0 = arith.constant 0 : i32
    return %arg0, %c0_i32 : i32, i32
  }
  func.func @transform_8(%arg0: i32) -> (i32, i32) {
    %c0_i32 = arith.constant 0 : i32
    %c0_i32_0 = arith.constant 0 : i32
    return %arg0, %c0_i32 : i32, i32
  }
  func.func @transform_9(%arg0: i32) -> (i32, i32) {
    %c0_i32 = arith.constant 0 : i32
    %c0_i32_0 = arith.constant 0 : i32
    return %arg0, %c0_i32 : i32, i32
  }
}

</mosaic_0001>

<llo_original>
// kernel: tpu_custom_call.1
$region0: #{tpu_custom_call.1}
  #allocation0 [shape = 'u32[]', space=smem, size = 0x4, offset = 0x4, fixed_abs, tag = 'smem constant byte address 0x4 - core index']
  #allocation1 [shape = 'u32[72,128]{1,0:T(1,128)}', space=vmem, size = 0x9000, scoped, tag = 'internal scratch']
  %s0 = inlined_call_operand.hbm [shape: f32[16,256], index: 0, kind: input, shape index: {}]
  %s1 = inlined_call_operand.hbm [shape: bf16[256,256], index: 1, kind: input, shape index: {}]
  %s2 = inlined_call_operand.hbm [shape: bf16[256,256], index: 2, kind: input, shape index: {}]
  %s3 = inlined_call_operand.hbm [shape: bf16[256,256], index: 3, kind: input, shape index: {}]
  %s4 = inlined_call_operand.vmem [shape: f32[1,256], index: 4, kind: input, shape index: {}]
  %s5 = inlined_call_operand.vmem [shape: f32[1,256], index: 5, kind: input, shape index: {}]
  %s6 = inlined_call_operand.hbm [shape: f32[1,256], index: 6, kind: input, shape index: {}]
  %s7 = inlined_call_operand.hbm [shape: bf16[16,256], index: 7, kind: output, shape index: {0}]
  %s8 = inlined_call_operand.hbm [shape: bf16[16,256], index: 8, kind: output, shape index: {1}]
  %s9 = inlined_call_operand.hbm [shape: bf16[16,256], index: 9, kind: output, shape index: {2}]
  %10 = xla_tuple %s7, %s8, %s9
  %s11 = sld [smem:[#allocation0]]
  $region74: #{tpu_custom_call.1} parent=0
    _
  %s13 = ssub.s32 1, %s11
  %s14 = scalar_select 0, %s13, %s11
  $region1: #{tpu_custom_call.1} parent=0
    #allocation2 [shape = 'u8[16384]{0}', space=vmem, size = 0x4000, scoped, tag = 'input window, operand 0, single buffered']
    #allocation3 [shape = 's32[1]{0}', space=sflag, size = 0x4, scoped, tag = 'scoped memory for tpu_custom_call.1']
    #allocation4 [shape = 's32[1]{0}', space=sflag, size = 0x4, scoped, tag = 'scoped memory for tpu_custom_call.1']
    #allocation5 [shape = 'u8[131072]{0}', space=vmem, size = 0x20000, scoped, tag = 'input window, operand 1, single buffered']
    #allocation6 [shape = 's32[1]{0}', space=sflag, size = 0x4, scoped, tag = 'scoped memory for tpu_custom_call.1']
    #allocation7 [shape = 'u8[131072]{0}', space=vmem, size = 0x20000, scoped, tag = 'input window, operand 2, single buffered']
    #allocation8 [shape = 'u8[131072]{0}', space=vmem, size = 0x20000, scoped, tag = 'input window, operand 3, single buffered']
    #allocation9 [shape = 's32[1]{0}', space=sflag, size = 0x4, scoped, tag = 'scoped memory for tpu_custom_call.1']
    #allocation10 [shape = 'u8[1024]{0}', space=vmem, size = 0x400, scoped, tag = 'input window, operand 6, single buffered']
    #allocation11 [shape = 'u8[8192]{0}', space=vmem, size = 0x2000, scoped, tag = 'output window, operand 0, single buffered']
    #allocation12 [shape = 'u8[8192]{0}', space=vmem, size = 0x2000, scoped, tag = 'output window, operand 1, single buffered']
    #allocation13 [shape = 's32[1]{0}', space=sflag, size = 0x4, scoped, tag = 'scoped memory for tpu_custom_call.1']
    #allocation14 [shape = 'u8[8192]{0}', space=vmem, size = 0x2000, scoped, tag = 'output window, operand 2, single buffered']
    %15 = vsyncpa [#allocation3], 0
    %16 = vsyncpa [#allocation6], 0
    %17 = vsyncpa [#allocation9], 0
    %18 = vsyncpa [#allocation4], 0
    %19 = vsyncpa [#allocation13], 0
    // Predicated region
    $region2: #{tpu_custom_call.1} parent=1 // pred_check
      _
    $region3: #{tpu_custom_call.1} parent=1 // pred_check_branch
      %21 = sbr.rel (0) target = $region5
    $region4: #{tpu_custom_call.1} parent=1 // pred_region
      %23 = vsyncadd [#allocation3], 0
      %s24 = sshll.u32 %s0, 4
      %s25 = int_to_ptr.hbm [resolvable:$true] %s24
      %s26 = sshll.u32 [#allocation2], 4
      %s27 = int_to_ptr.vmem [resolvable:$true] %s26
      %32 = dma.hbm_to_vmem [thread:$0]  %s25, 512, %s27, [#allocation3], 256, 256, 16
    $region5: #{tpu_custom_call.1} parent=1 // pred_fallthru
      _
    // Predicated region
    $region6: #{tpu_custom_call.1} parent=1 // pred_check
      _
    $region7: #{tpu_custom_call.1} parent=1 // pred_check_branch
      %34 = sbr.rel (0) target = $region9
    $region8: #{tpu_custom_call.1} parent=1 // pred_region
      %36 = vsyncadd [#allocation6], 0
      %s37 = sshll.u32 %s1, 4
      %s38 = int_to_ptr.hbm [resolvable:$true] %s37
      %s39 = sshll.u32 [#allocation5], 4
      %s40 = int_to_ptr.vmem [resolvable:$true] %s39
      %45 = dma.hbm_to_vmem [thread:$0]  %s38, 4096, %s40, [#allocation6], 128, 128, 8
    $region9: #{tpu_custom_call.1} parent=1 // pred_fallthru
      _
    // Predicated region
    $region10: #{tpu_custom_call.1} parent=1 // pred_check
      _
    $region11: #{tpu_custom_call.1} parent=1 // pred_check_branch
      %47 = sbr.rel (0) target = $region13
    $region12: #{tpu_custom_call.1} parent=1 // pred_region
      %49 = vsyncadd [#allocation6], 0
      %s50 = sshll.u32 %s2, 4
      %s51 = int_to_ptr.hbm [resolvable:$true] %s50
      %s52 = sshll.u32 [#allocation7], 4
      %s53 = int_to_ptr.vmem [resolvable:$true] %s52
      %58 = dma.hbm_to_vmem [thread:$0]  %s51, 4096, %s53, [#allocation6], 128, 128, 8
    $region13: #{tpu_custom_call.1} parent=1 // pred_fallthru
      _
    // Predicated region
    $region14: #{tpu_custom_call.1} parent=1 // pred_check
      _
    $region15: #{tpu_custom_call.1} parent=1 // pred_check_branch
      %60 = sbr.rel (0) target = $region17
    $region16: #{tpu_custom_call.1} parent=1 // pred_region
      %62 = vsyncadd [#allocation9], 0
      %s63 = sshll.u32 %s3, 4
      %s64 = int_to_ptr.hbm [resolvable:$true] %s63
      %s65 = sshll.u32 [#allocation8], 4
      %s66 = int_to_ptr.vmem [resolvable:$true] %s65
      %71 = dma.hbm_to_vmem [thread:$0]  %s64, 4096, %s66, [#allocation9], 128, 128, 8
    $region17: #{tpu_custom_call.1} parent=1 // pred_fallthru
      _
    // Predicated region
    $region18: #{tpu_custom_call.1} parent=1 // pred_check
      _
    $region19: #{tpu_custom_call.1} parent=1 // pred_check_branch
      %73 = sbr.rel (0) target = $region21
    $region20: #{tpu_custom_call.1} parent=1 // pred_region
      _
    $region21: #{tpu_custom_call.1} parent=1 // pred_fallthru
      _
    // Predicated region
    $region22: #{tpu_custom_call.1} parent=1 // pred_check
      _
    $region23: #{tpu_custom_call.1} parent=1 // pred_check_branch
      %75 = sbr.rel (0) target = $region25
    $region24: #{tpu_custom_call.1} parent=1 // pred_region
      _
    $region25: #{tpu_custom_call.1} parent=1 // pred_fallthru
      _
    // Predicated region
    $region26: #{tpu_custom_call.1} parent=1 // pred_check
      _
    $region27: #{tpu_custom_call.1} parent=1 // pred_check_branch
      %77 = sbr.rel (0) target = $region29
    $region28: #{tpu_custom_call.1} parent=1 // pred_region
      %79 = vsyncadd [#allocation9], 0
      %s81 = sshll.u32 %s6, 4
      %s82 = int_to_ptr.hbm [resolvable:$true] %s81
      %s83 = sshll.u32 [#allocation10], 4
      %s84 = int_to_ptr.vmem [resolvable:$true] %s83
      %86 = dma.hbm_to_vmem [thread:$0]  %s82, 32, %s84, [#allocation9]
    $region29: #{tpu_custom_call.1} parent=1 // pred_fallthru
      _
    // Predicated region
    $region30: #{tpu_custom_call.1} parent=1 // pred_check
      _
    $region31: #{tpu_custom_call.1} parent=1 // pred_check_branch
      %88 = sbr.rel (0) target = $region33
    $region32: #{tpu_custom_call.1} parent=1 // pred_region
      %90 = dma.done [#allocation3], 512
    $region33: #{tpu_custom_call.1} parent=1 // pred_fallthru
      _
    // Predicated region
    $region34: #{tpu_custom_call.1} parent=1 // pred_check
      _
    $region35: #{tpu_custom_call.1} parent=1 // pred_check_branch
      %92 = sbr.rel (0) target = $region37
    $region36: #{tpu_custom_call.1} parent=1 // pred_region
      %94 = dma.done [#allocation6], 4096
    $region37: #{tpu_custom_call.1} parent=1 // pred_fallthru
      _
    // Predicated region
    $region38: #{tpu_custom_call.1} parent=1 // pred_check
      _
    $region39: #{tpu_custom_call.1} parent=1 // pred_check_branch
      %96 = sbr.rel (0) target = $region41
    $region40: #{tpu_custom_call.1} parent=1 // pred_region
      %98 = dma.done [#allocation6], 4096
    $region41: #{tpu_custom_call.1} parent=1 // pred_fallthru
      _
    // Predicated region
    $region42: #{tpu_custom_call.1} parent=1 // pred_check
      _
    $region43: #{tpu_custom_call.1} parent=1 // pred_check_branch
      %100 = sbr.rel (0) target = $region45
    $region44: #{tpu_custom_call.1} parent=1 // pred_region
      %102 = dma.done [#allocation9], 4096
    $region45: #{tpu_custom_call.1} parent=1 // pred_fallthru
      _
    // Predicated region
    $region46: #{tpu_custom_call.1} parent=1 // pred_check
      _
    $region47: #{tpu_custom_call.1} parent=1 // pred_check_branch
      %104 = sbr.rel (0) target = $region49
    $region48: #{tpu_custom_call.1} parent=1 // pred_region
      %106 = dma.done [#allocation9], 32
    $region49: #{tpu_custom_call.1} parent=1 // pred_fallthru
      _
    %v107 = vld [vmem:[#allocation2] sm:$0xff]
    %v108 = vld [vmem:[#allocation2 + $0x8] sm:$0xff]
    %v109 = vld [vmem:[#allocation2 + $0x10] sm:$0xff]
    %v110 = vld [vmem:[#allocation2 + $0x18] sm:$0xff]
    %v111 = vpack.c.bf16 %v109, %v107
    %v112 = vpack.c.bf16 %v110, %v108
    %v113 = vld [vmem:[#allocation5] sm:$0xff]
    %v114 = vld [vmem:[#allocation5 + $0x8] sm:$0xff]
    %v115 = vld [vmem:[#allocation5 + $0x10] sm:$0xff]
    %v116 = vld [vmem:[#allocation5 + $0x18] sm:$0xff]
    %v117 = vld [vmem:[#allocation5 + $0x20] sm:$0xff]
    %v118 = vld [vmem:[#allocation5 + $0x28] sm:$0xff]
    %v119 = vld [vmem:[#allocation5 + $0x30] sm:$0xff]
    %v120 = vld [vmem:[#allocation5 + $0x38] sm:$0xff]
    %v121 = vld [vmem:[#allocation5 + $0x40] sm:$0xff]
    %v122 = vld [vmem:[#allocation5 + $0x48] sm:$0xff]
    %v123 = vld [vmem:[#allocation5 + $0x50] sm:$0xff]
    %v124 = vld [vmem:[#allocation5 + $0x58] sm:$0xff]
    %v125 = vld [vmem:[#allocation5 + $0x60] sm:$0xff]
    %v126 = vld [vmem:[#allocation5 + $0x68] sm:$0xff]
    %v127 = vld [vmem:[#allocation5 + $0x70] sm:$0xff]
    %v128 = vld [vmem:[#allocation5 + $0x78] sm:$0xff]
    %v129 = vld [vmem:[#allocation5 + $0x80] sm:$0xff]
    %v130 = vld [vmem:[#allocation5 + $0x88] sm:$0xff]
    %v131 = vld [vmem:[#allocation5 + $0x90] sm:$0xff]
    %v132 = vld [vmem:[#allocation5 + $0x98] sm:$0xff]
    %v133 = vld [vmem:[#allocation5 + $0xa0] sm:$0xff]
    %v134 = vld [vmem:[#allocation5 + $0xa8] sm:$0xff]
    %v135 = vld [vmem:[#allocation5 + $0xb0] sm:$0xff]
    %v136 = vld [vmem:[#allocation5 + $0xb8] sm:$0xff]
    %v137 = vld [vmem:[#allocation5 + $0xc0] sm:$0xff]
    %v138 = vld [vmem:[#allocation5 + $0xc8] sm:$0xff]
    %v139 = vld [vmem:[#allocation5 + $0xd0] sm:$0xff]
    %v140 = vld [vmem:[#allocation5 + $0xd8] sm:$0xff]
    %v141 = vld [vmem:[#allocation5 + $0xe0] sm:$0xff]
    %v142 = vld [vmem:[#allocation5 + $0xe8] sm:$0xff]
    %v143 = vld [vmem:[#allocation5 + $0xf0] sm:$0xff]
    %v144 = vld [vmem:[#allocation5 + $0xf8] sm:$0xff]
    %v145 = vld [vmem:[%s4] sm:$0x3]
    %v147 = vperm.slane %v145, 0
    %v148 = vperm.slane %v145, 1
    %v183 = vunpack.c.l.b16 %v113
    %v184 = vunpack.c.h.b16 %v113
    %v185 = vunpack.c.l.b16 %v114
    %v186 = vunpack.c.h.b16 %v114
    %v187 = vunpack.c.l.b16 %v115
    %v188 = vunpack.c.h.b16 %v115
    %v189 = vunpack.c.l.b16 %v116
    %v190 = vunpack.c.h.b16 %v116
    %v191 = vunpack.c.l.b16 %v117
    %v192 = vunpack.c.h.b16 %v117
    %v193 = vunpack.c.l.b16 %v118
    %v194 = vunpack.c.h.b16 %v118
    %v195 = vunpack.c.l.b16 %v119
    %v196 = vunpack.c.h.b16 %v119
    %v197 = vunpack.c.l.b16 %v120
    %v198 = vunpack.c.h.b16 %v120
    %v199 = vunpack.c.l.b16 %v121
    %v200 = vunpack.c.h.b16 %v121
    %v201 = vunpack.c.l.b16 %v122
    %v202 = vunpack.c.h.b16 %v122
    %v203 = vunpack.c.l.b16 %v123
    %v204 = vunpack.c.h.b16 %v123
    %v205 = vunpack.c.l.b16 %v124
    %v206 = vunpack.c.h.b16 %v124
    %v207 = vunpack.c.l.b16 %v125
    %v208 = vunpack.c.h.b16 %v125
    %v209 = vunpack.c.l.b16 %v126
    %v210 = vunpack.c.h.b16 %v126
    %v211 = vunpack.c.l.b16 %v127
    %v212 = vunpack.c.h.b16 %v127
    %v213 = vunpack.c.l.b16 %v128
    %v214 = vunpack.c.h.b16 %v128
    %v215 = vunpack.c.l.b16 %v129
    %v216 = vunpack.c.h.b16 %v129
    %v217 = vunpack.c.l.b16 %v130
    %v218 = vunpack.c.h.b16 %v130
    %v219 = vunpack.c.l.b16 %v131
    %v220 = vunpack.c.h.b16 %v131
    %v221 = vunpack.c.l.b16 %v132
    %v222 = vunpack.c.h.b16 %v132
    %v223 = vunpack.c.l.b16 %v133
    %v224 = vunpack.c.h.b16 %v133
    %v225 = vunpack.c.l.b16 %v134
    %v226 = vunpack.c.h.b16 %v134
    %v227 = vunpack.c.l.b16 %v135
    %v228 = vunpack.c.h.b16 %v135
    %v229 = vunpack.c.l.b16 %v136
    %v230 = vunpack.c.h.b16 %v136
    %v231 = vunpack.c.l.b16 %v137
    %v232 = vunpack.c.h.b16 %v137
    %v233 = vunpack.c.l.b16 %v138
    %v234 = vunpack.c.h.b16 %v138
    %v235 = vunpack.c.l.b16 %v139
    %v236 = vunpack.c.h.b16 %v139
    %v237 = vunpack.c.l.b16 %v140
    %v238 = vunpack.c.h.b16 %v140
    %v239 = vunpack.c.l.b16 %v141
    %v240 = vunpack.c.h.b16 %v141
    %v241 = vunpack.c.l.b16 %v142
    %v242 = vunpack.c.h.b16 %v142
    %v243 = vunpack.c.l.b16 %v143
    %v244 = vunpack.c.h.b16 %v143
    %v245 = vunpack.c.l.b16 %v144
    %v246 = vunpack.c.h.b16 %v144
    %v247 = vpack.c.b16 %v185, %v183
    %v248 = vpack.c.b16 %v186, %v184
    %v249 = vpack.c.b16 %v189, %v187
    %v250 = vpack.c.b16 %v190, %v188
    %v251 = vpack.c.b16 %v193, %v191
    %v252 = vpack.c.b16 %v194, %v192
    %v253 = vpack.c.b16 %v197, %v195
    %v254 = vpack.c.b16 %v198, %v196
    %v255 = vpack.c.b16 %v201, %v199
    %v256 = vpack.c.b16 %v202, %v200
    %v257 = vpack.c.b16 %v205, %v203
    %v258 = vpack.c.b16 %v206, %v204
    %v259 = vpack.c.b16 %v209, %v207
    %v260 = vpack.c.b16 %v210, %v208
    %v261 = vpack.c.b16 %v213, %v211
    %v262 = vpack.c.b16 %v214, %v212
    %v263 = vpack.c.b16 %v217, %v215
    %v264 = vpack.c.b16 %v218, %v216
    %v265 = vpack.c.b16 %v221, %v219
    %v266 = vpack.c.b16 %v222, %v220
    %v267 = vpack.c.b16 %v225, %v223
    %v268 = vpack.c.b16 %v226, %v224
    %v269 = vpack.c.b16 %v229, %v227
    %v270 = vpack.c.b16 %v230, %v228
    %v271 = vpack.c.b16 %v233, %v231
    %v272 = vpack.c.b16 %v234, %v232
    %v273 = vpack.c.b16 %v237, %v235
    %v274 = vpack.c.b16 %v238, %v236
    %v275 = vpack.c.b16 %v241, %v239
    %v276 = vpack.c.b16 %v242, %v240
    %v277 = vpack.c.b16 %v245, %v243
    %v278 = vpack.c.b16 %v246, %v244
    %311 = vmatpush.bf16.msra.mxu0 %v261
    %312 = vmatpush.bf16.msra.mxu0 %v259
    %313 = vmatpush.bf16.msra.mxu0 %v257
    %314 = vmatpush.bf16.msra.mxu0 %v255
    %315 = vmatpush.bf16.msra.mxu0 %v253
    %316 = vmatpush.bf16.msra.mxu0 %v251
    %317 = vmatpush.bf16.msra.mxu0 %v249
    %318 = vmatpush.bf16.msra.mxu0 %v247
    %319 = vmatmul.bf16.gmra.mxu0 %v111
    %v320 = vpop.f32.mrf.mxu0
    %v321 = vadd.f32 %v147, %v320
    %v322 = vpop.f32.mrf.mxu0
    %v323 = vadd.f32 %v147, %v322
    %324 = vdwg.mxu0
    %325 = vmatpush.bf16.msra.mxu0 %v277
    %326 = vmatpush.bf16.msra.mxu0 %v275
    %327 = vmatpush.bf16.msra.mxu0 %v273
    %328 = vmatpush.bf16.msra.mxu0 %v271
    %329 = vmatpush.bf16.msra.mxu0 %v269
    %330 = vmatpush.bf16.msra.mxu0 %v267
    %331 = vmatpush.bf16.msra.mxu0 %v265
    %332 = vmatpush.bf16.msra.mxu0 %v263
    %333 = vmatmul.bf16.gmra.mxu0 %v112
    %v334 = vpop.f32.mrf.mxu0
    %v335 = vadd.f32 %v321, %v334
    %v336 = vpop.f32.mrf.mxu0
    %v337 = vadd.f32 %v323, %v336
    %338 = vdwg.mxu0
    %339 = vmatpush.bf16.msra.mxu0 %v262
    %340 = vmatpush.bf16.msra.mxu0 %v260
    %341 = vmatpush.bf16.msra.mxu0 %v258
    %342 = vmatpush.bf16.msra.mxu0 %v256
    %343 = vmatpush.bf16.msra.mxu0 %v254
    %344 = vmatpush.bf16.msra.mxu0 %v252
    %345 = vmatpush.bf16.msra.mxu0 %v250
    %346 = vmatpush.bf16.msra.mxu0 %v248
    %347 = vmatmul.bf16.gmra.mxu0 %v111
    %v348 = vpop.f32.mrf.mxu0
    %v349 = vadd.f32 %v148, %v348
    %v350 = vpop.f32.mrf.mxu0
    %v351 = vadd.f32 %v148, %v350
    %352 = vdwg.mxu0
    %353 = vmatpush.bf16.msra.mxu0 %v278
    %354 = vmatpush.bf16.msra.mxu0 %v276
    %355 = vmatpush.bf16.msra.mxu0 %v274
    %356 = vmatpush.bf16.msra.mxu0 %v272
    %357 = vmatpush.bf16.msra.mxu0 %v270
    %358 = vmatpush.bf16.msra.mxu0 %v268
    %359 = vmatpush.bf16.msra.mxu0 %v266
    %360 = vmatpush.bf16.msra.mxu0 %v264
    %361 = vmatmul.bf16.gmra.mxu0 %v112
    %v362 = vpop.f32.mrf.mxu0
    %v363 = vadd.f32 %v349, %v362
    %v364 = vpop.f32.mrf.mxu0
    %v365 = vadd.f32 %v351, %v364
    %366 = vdwg.mxu0
    %v367 = vpack.c.bf16 %v363, %v335
    %v368 = vpack.c.bf16 %v365, %v337
    %369 = vst [vmem:[#allocation11] sm:$0xff] %v367
    %370 = vst [vmem:[#allocation11 + $0x8] sm:$0xff] %v368
    %v371 = vld [vmem:[#allocation7] sm:$0xff]
    %v372 = vld [vmem:[#allocation7 + $0x8] sm:$0xff]
    %v373 = vld [vmem:[#allocation7 + $0x10] sm:$0xff]
    %v374 = vld [vmem:[#allocation7 + $0x18] sm:$0xff]
    %v375 = vld [vmem:[#allocation7 + $0x20] sm:$0xff]
    %v376 = vld [vmem:[#allocation7 + $0x28] sm:$0xff]
    %v377 = vld [vmem:[#allocation7 + $0x30] sm:$0xff]
    %v378 = vld [vmem:[#allocation7 + $0x38] sm:$0xff]
    %v379 = vld [vmem:[#allocation7 + $0x40] sm:$0xff]
    %v380 = vld [vmem:[#allocation7 + $0x48] sm:$0xff]
    %v381 = vld [vmem:[#allocation7 + $0x50] sm:$0xff]
    %v382 = vld [vmem:[#allocation7 + $0x58] sm:$0xff]
    %v383 = vld [vmem:[#allocation7 + $0x60] sm:$0xff]
    %v384 = vld [vmem:[#allocation7 + $0x68] sm:$0xff]
    %v385 = vld [vmem:[#allocation7 + $0x70] sm:$0xff]
    %v386 = vld [vmem:[#allocation7 + $0x78] sm:$0xff]
    %v387 = vld [vmem:[#allocation7 + $0x80] sm:$0xff]
    %v388 = vld [vmem:[#allocation7 + $0x88] sm:$0xff]
    %v389 = vld [vmem:[#allocation7 + $0x90] sm:$0xff]
    %v390 = vld [vmem:[#allocation7 + $0x98] sm:$0xff]
    %v391 = vld [vmem:[#allocation7 + $0xa0] sm:$0xff]
    %v392 = vld [vmem:[#allocation7 + $0xa8] sm:$0xff]
    %v393 = vld [vmem:[#allocation7 + $0xb0] sm:$0xff]
    %v394 = vld [vmem:[#allocation7 + $0xb8] sm:$0xff]
    %v395 = vld [vmem:[#allocation7 + $0xc0] sm:$0xff]
    %v396 = vld [vmem:[#allocation7 + $0xc8] sm:$0xff]
    %v397 = vld [vmem:[#allocation7 + $0xd0] sm:$0xff]
    %v398 = vld [vmem:[#allocation7 + $0xd8] sm:$0xff]
    %v399 = vld [vmem:[#allocation7 + $0xe0] sm:$0xff]
    %v400 = vld [vmem:[#allocation7 + $0xe8] sm:$0xff]
    %v401 = vld [vmem:[#allocation7 + $0xf0] sm:$0xff]
    %v402 = vld [vmem:[#allocation7 + $0xf8] sm:$0xff]
    %v403 = vld [vmem:[%s5] sm:$0x3]
    %v405 = vperm.slane %v403, 0
    %v406 = vperm.slane %v403, 1
    %v441 = vunpack.c.l.b16 %v371
    %v442 = vunpack.c.h.b16 %v371
    %v443 = vunpack.c.l.b16 %v372
    %v444 = vunpack.c.h.b16 %v372
    %v445 = vunpack.c.l.b16 %v373
    %v446 = vunpack.c.h.b16 %v373
    %v447 = vunpack.c.l.b16 %v374
    %v448 = vunpack.c.h.b16 %v374
    %v449 = vunpack.c.l.b16 %v375
    %v450 = vunpack.c.h.b16 %v375
    %v451 = vunpack.c.l.b16 %v376
    %v452 = vunpack.c.h.b16 %v376
    %v453 = vunpack.c.l.b16 %v377
    %v454 = vunpack.c.h.b16 %v377
    %v455 = vunpack.c.l.b16 %v378
    %v456 = vunpack.c.h.b16 %v378
    %v457 = vunpack.c.l.b16 %v379
    %v458 = vunpack.c.h.b16 %v379
    %v459 = vunpack.c.l.b16 %v380
    %v460 = vunpack.c.h.b16 %v380
    %v461 = vunpack.c.l.b16 %v381
    %v462 = vunpack.c.h.b16 %v381
    %v463 = vunpack.c.l.b16 %v382
    %v464 = vunpack.c.h.b16 %v382
    %v465 = vunpack.c.l.b16 %v383
    %v466 = vunpack.c.h.b16 %v383
    %v467 = vunpack.c.l.b16 %v384
    %v468 = vunpack.c.h.b16 %v384
    %v469 = vunpack.c.l.b16 %v385
    %v470 = vunpack.c.h.b16 %v385
    %v471 = vunpack.c.l.b16 %v386
    %v472 = vunpack.c.h.b16 %v386
    %v473 = vunpack.c.l.b16 %v387
    %v474 = vunpack.c.h.b16 %v387
    %v475 = vunpack.c.l.b16 %v388
    %v476 = vunpack.c.h.b16 %v388
    %v477 = vunpack.c.l.b16 %v389
    %v478 = vunpack.c.h.b16 %v389
    %v479 = vunpack.c.l.b16 %v390
    %v480 = vunpack.c.h.b16 %v390
    %v481 = vunpack.c.l.b16 %v391
    %v482 = vunpack.c.h.b16 %v391
    %v483 = vunpack.c.l.b16 %v392
    %v484 = vunpack.c.h.b16 %v392
    %v485 = vunpack.c.l.b16 %v393
    %v486 = vunpack.c.h.b16 %v393
    %v487 = vunpack.c.l.b16 %v394
    %v488 = vunpack.c.h.b16 %v394
    %v489 = vunpack.c.l.b16 %v395
    %v490 = vunpack.c.h.b16 %v395
    %v491 = vunpack.c.l.b16 %v396
    %v492 = vunpack.c.h.b16 %v396
    %v493 = vunpack.c.l.b16 %v397
    %v494 = vunpack.c.h.b16 %v397
    %v495 = vunpack.c.l.b16 %v398
    %v496 = vunpack.c.h.b16 %v398
    %v497 = vunpack.c.l.b16 %v399
    %v498 = vunpack.c.h.b16 %v399
    %v499 = vunpack.c.l.b16 %v400
    %v500 = vunpack.c.h.b16 %v400
    %v501 = vunpack.c.l.b16 %v401
    %v502 = vunpack.c.h.b16 %v401
    %v503 = vunpack.c.l.b16 %v402
    %v504 = vunpack.c.h.b16 %v402
    %v505 = vpack.c.b16 %v443, %v441
    %v506 = vpack.c.b16 %v444, %v442
    %v507 = vpack.c.b16 %v447, %v445
    %v508 = vpack.c.b16 %v448, %v446
    %v509 = vpack.c.b16 %v451, %v449
    %v510 = vpack.c.b16 %v452, %v450
    %v511 = vpack.c.b16 %v455, %v453
    %v512 = vpack.c.b16 %v456, %v454
    %v513 = vpack.c.b16 %v459, %v457
    %v514 = vpack.c.b16 %v460, %v458
    %v515 = vpack.c.b16 %v463, %v461
    %v516 = vpack.c.b16 %v464, %v462
    %v517 = vpack.c.b16 %v467, %v465
    %v518 = vpack.c.b16 %v468, %v466
    %v519 = vpack.c.b16 %v471, %v469
    %v520 = vpack.c.b16 %v472, %v470
    %v521 = vpack.c.b16 %v475, %v473
    %v522 = vpack.c.b16 %v476, %v474
    %v523 = vpack.c.b16 %v479, %v477
    %v524 = vpack.c.b16 %v480, %v478
    %v525 = vpack.c.b16 %v483, %v481
    %v526 = vpack.c.b16 %v484, %v482
    %v527 = vpack.c.b16 %v487, %v485
    %v528 = vpack.c.b16 %v488, %v486
    %v529 = vpack.c.b16 %v491, %v489
    %v530 = vpack.c.b16 %v492, %v490
    %v531 = vpack.c.b16 %v495, %v493
    %v532 = vpack.c.b16 %v496, %v494
    %v533 = vpack.c.b16 %v499, %v497
    %v534 = vpack.c.b16 %v500, %v498
    %v535 = vpack.c.b16 %v503, %v501
    %v536 = vpack.c.b16 %v504, %v502
    %569 = vmatpush.bf16.msra.mxu0 %v519
    %570 = vmatpush.bf16.msra.mxu0 %v517
    %571 = vmatpush.bf16.msra.mxu0 %v515
    %572 = vmatpush.bf16.msra.mxu0 %v513
    %573 = vmatpush.bf16.msra.mxu0 %v511
    %574 = vmatpush.bf16.msra.mxu0 %v509
    %575 = vmatpush.bf16.msra.mxu0 %v507
    %576 = vmatpush.bf16.msra.mxu0 %v505
    %577 = vmatmul.bf16.gmra.mxu0 %v111
    %v578 = vpop.f32.mrf.mxu0
    %v579 = vadd.f32 %v405, %v578
    %v580 = vpop.f32.mrf.mxu0
    %v581 = vadd.f32 %v405, %v580
    %582 = vdwg.mxu0
    %583 = vmatpush.bf16.msra.mxu0 %v535
    %584 = vmatpush.bf16.msra.mxu0 %v533
    %585 = vmatpush.bf16.msra.mxu0 %v531
    %586 = vmatpush.bf16.msra.mxu0 %v529
    %587 = vmatpush.bf16.msra.mxu0 %v527
    %588 = vmatpush.bf16.msra.mxu0 %v525
    %589 = vmatpush.bf16.msra.mxu0 %v523
    %590 = vmatpush.bf16.msra.mxu0 %v521
    %591 = vmatmul.bf16.gmra.mxu0 %v112
    %v592 = vpop.f32.mrf.mxu0
    %v593 = vadd.f32 %v579, %v592
    %v594 = vpop.f32.mrf.mxu0
    %v595 = vadd.f32 %v581, %v594
    %596 = vdwg.mxu0
    %597 = vmatpush.bf16.msra.mxu0 %v520
    %598 = vmatpush.bf16.msra.mxu0 %v518
    %599 = vmatpush.bf16.msra.mxu0 %v516
    %600 = vmatpush.bf16.msra.mxu0 %v514
    %601 = vmatpush.bf16.msra.mxu0 %v512
    %602 = vmatpush.bf16.msra.mxu0 %v510
    %603 = vmatpush.bf16.msra.mxu0 %v508
    %604 = vmatpush.bf16.msra.mxu0 %v506
    %605 = vmatmul.bf16.gmra.mxu0 %v111
    %v606 = vpop.f32.mrf.mxu0
    %v607 = vadd.f32 %v406, %v606
    %v608 = vpop.f32.mrf.mxu0
    %v609 = vadd.f32 %v406, %v608
    %610 = vdwg.mxu0
    %611 = vmatpush.bf16.msra.mxu0 %v536
    %612 = vmatpush.bf16.msra.mxu0 %v534
    %613 = vmatpush.bf16.msra.mxu0 %v532
    %614 = vmatpush.bf16.msra.mxu0 %v530
    %615 = vmatpush.bf16.msra.mxu0 %v528
    %616 = vmatpush.bf16.msra.mxu0 %v526
    %617 = vmatpush.bf16.msra.mxu0 %v524
    %618 = vmatpush.bf16.msra.mxu0 %v522
    %619 = vmatmul.bf16.gmra.mxu0 %v112
    %v620 = vpop.f32.mrf.mxu0
    %v621 = vadd.f32 %v607, %v620
    %v622 = vpop.f32.mrf.mxu0
    %v623 = vadd.f32 %v609, %v622
    %624 = vdwg.mxu0
    %v625 = vpack.c.bf16 %v621, %v593
    %v626 = vpack.c.bf16 %v623, %v595
    %627 = vst [vmem:[#allocation12] sm:$0xff] %v625
    %628 = vst [vmem:[#allocation12 + $0x8] sm:$0xff] %v626
    %v629 = vld [vmem:[#allocation8] sm:$0xff]
    %v630 = vld [vmem:[#allocation8 + $0x8] sm:$0xff]
    %v631 = vld [vmem:[#allocation8 + $0x10] sm:$0xff]
    %v632 = vld [vmem:[#allocation8 + $0x18] sm:$0xff]
    %v633 = vld [vmem:[#allocation8 + $0x20] sm:$0xff]
    %v634 = vld [vmem:[#allocation8 + $0x28] sm:$0xff]
    %v635 = vld [vmem:[#allocation8 + $0x30] sm:$0xff]
    %v636 = vld [vmem:[#allocation8 + $0x38] sm:$0xff]
    %v637 = vld [vmem:[#allocation8 + $0x40] sm:$0xff]
    %v638 = vld [vmem:[#allocation8 + $0x48] sm:$0xff]
    %v639 = vld [vmem:[#allocation8 + $0x50] sm:$0xff]
    %v640 = vld [vmem:[#allocation8 + $0x58] sm:$0xff]
    %v641 = vld [vmem:[#allocation8 + $0x60] sm:$0xff]
    %v642 = vld [vmem:[#allocation8 + $0x68] sm:$0xff]
    %v643 = vld [vmem:[#allocation8 + $0x70] sm:$0xff]
    %v644 = vld [vmem:[#allocation8 + $0x78] sm:$0xff]
    %v645 = vld [vmem:[#allocation8 + $0x80] sm:$0xff]
    %v646 = vld [vmem:[#allocation8 + $0x88] sm:$0xff]
    %v647 = vld [vmem:[#allocation8 + $0x90] sm:$0xff]
    %v648 = vld [vmem:[#allocation8 + $0x98] sm:$0xff]
    %v649 = vld [vmem:[#allocation8 + $0xa0] sm:$0xff]
    %v650 = vld [vmem:[#allocation8 + $0xa8] sm:$0xff]
    %v651 = vld [vmem:[#allocation8 + $0xb0] sm:$0xff]
    %v652 = vld [vmem:[#allocation8 + $0xb8] sm:$0xff]
    %v653 = vld [vmem:[#allocation8 + $0xc0] sm:$0xff]
    %v654 = vld [vmem:[#allocation8 + $0xc8] sm:$0xff]
    %v655 = vld [vmem:[#allocation8 + $0xd0] sm:$0xff]
    %v656 = vld [vmem:[#allocation8 + $0xd8] sm:$0xff]
    %v657 = vld [vmem:[#allocation8 + $0xe0] sm:$0xff]
    %v658 = vld [vmem:[#allocation8 + $0xe8] sm:$0xff]
    %v659 = vld [vmem:[#allocation8 + $0xf0] sm:$0xff]
    %v660 = vld [vmem:[#allocation8 + $0xf8] sm:$0xff]
    %v661 = vld [vmem:[#allocation10] sm:$0x3]
    %v663 = vperm.slane %v661, 0
    %v664 = vperm.slane %v661, 1
    %v699 = vunpack.c.l.b16 %v629
    %v700 = vunpack.c.h.b16 %v629
    %v701 = vunpack.c.l.b16 %v630
    %v702 = vunpack.c.h.b16 %v630
    %v703 = vunpack.c.l.b16 %v631
    %v704 = vunpack.c.h.b16 %v631
    %v705 = vunpack.c.l.b16 %v632
    %v706 = vunpack.c.h.b16 %v632
    %v707 = vunpack.c.l.b16 %v633
    %v708 = vunpack.c.h.b16 %v633
    %v709 = vunpack.c.l.b16 %v634
    %v710 = vunpack.c.h.b16 %v634
    %v711 = vunpack.c.l.b16 %v635
    %v712 = vunpack.c.h.b16 %v635
    %v713 = vunpack.c.l.b16 %v636
    %v714 = vunpack.c.h.b16 %v636
    %v715 = vunpack.c.l.b16 %v637
    %v716 = vunpack.c.h.b16 %v637
    %v717 = vunpack.c.l.b16 %v638
    %v718 = vunpack.c.h.b16 %v638
    %v719 = vunpack.c.l.b16 %v639
    %v720 = vunpack.c.h.b16 %v639
    %v721 = vunpack.c.l.b16 %v640
    %v722 = vunpack.c.h.b16 %v640
    %v723 = vunpack.c.l.b16 %v641
    %v724 = vunpack.c.h.b16 %v641
    %v725 = vunpack.c.l.b16 %v642
    %v726 = vunpack.c.h.b16 %v642
    %v727 = vunpack.c.l.b16 %v643
    %v728 = vunpack.c.h.b16 %v643
    %v729 = vunpack.c.l.b16 %v644
    %v730 = vunpack.c.h.b16 %v644
    %v731 = vunpack.c.l.b16 %v645
    %v732 = vunpack.c.h.b16 %v645
    %v733 = vunpack.c.l.b16 %v646
    %v734 = vunpack.c.h.b16 %v646
    %v735 = vunpack.c.l.b16 %v647
    %v736 = vunpack.c.h.b16 %v647
    %v737 = vunpack.c.l.b16 %v648
    %v738 = vunpack.c.h.b16 %v648
    %v739 = vunpack.c.l.b16 %v649
    %v740 = vunpack.c.h.b16 %v649
    %v741 = vunpack.c.l.b16 %v650
    %v742 = vunpack.c.h.b16 %v650
    %v743 = vunpack.c.l.b16 %v651
    %v744 = vunpack.c.h.b16 %v651
    %v745 = vunpack.c.l.b16 %v652
    %v746 = vunpack.c.h.b16 %v652
    %v747 = vunpack.c.l.b16 %v653
    %v748 = vunpack.c.h.b16 %v653
    %v749 = vunpack.c.l.b16 %v654
    %v750 = vunpack.c.h.b16 %v654
    %v751 = vunpack.c.l.b16 %v655
    %v752 = vunpack.c.h.b16 %v655
    %v753 = vunpack.c.l.b16 %v656
    %v754 = vunpack.c.h.b16 %v656
    %v755 = vunpack.c.l.b16 %v657
    %v756 = vunpack.c.h.b16 %v657
    %v757 = vunpack.c.l.b16 %v658
    %v758 = vunpack.c.h.b16 %v658
    %v759 = vunpack.c.l.b16 %v659
    %v760 = vunpack.c.h.b16 %v659
    %v761 = vunpack.c.l.b16 %v660
    %v762 = vunpack.c.h.b16 %v660
    %v763 = vpack.c.b16 %v701, %v699
    %v764 = vpack.c.b16 %v702, %v700
    %v765 = vpack.c.b16 %v705, %v703
    %v766 = vpack.c.b16 %v706, %v704
    %v767 = vpack.c.b16 %v709, %v707
    %v768 = vpack.c.b16 %v710, %v708
    %v769 = vpack.c.b16 %v713, %v711
    %v770 = vpack.c.b16 %v714, %v712
    %v771 = vpack.c.b16 %v717, %v715
    %v772 = vpack.c.b16 %v718, %v716
    %v773 = vpack.c.b16 %v721, %v719
    %v774 = vpack.c.b16 %v722, %v720
    %v775 = vpack.c.b16 %v725, %v723
    %v776 = vpack.c.b16 %v726, %v724
    %v777 = vpack.c.b16 %v729, %v727
    %v778 = vpack.c.b16 %v730, %v728
    %v779 = vpack.c.b16 %v733, %v731
    %v780 = vpack.c.b16 %v734, %v732
    %v781 = vpack.c.b16 %v737, %v735
    %v782 = vpack.c.b16 %v738, %v736
    %v783 = vpack.c.b16 %v741, %v739
    %v784 = vpack.c.b16 %v742, %v740
    %v785 = vpack.c.b16 %v745, %v743
    %v786 = vpack.c.b16 %v746, %v744
    %v787 = vpack.c.b16 %v749, %v747
    %v788 = vpack.c.b16 %v750, %v748
    %v789 = vpack.c.b16 %v753, %v751
    %v790 = vpack.c.b16 %v754, %v752
    %v791 = vpack.c.b16 %v757, %v755
    %v792 = vpack.c.b16 %v758, %v756
    %v793 = vpack.c.b16 %v761, %v759
    %v794 = vpack.c.b16 %v762, %v760
    %827 = vmatpush.bf16.msra.mxu0 %v777
    %828 = vmatpush.bf16.msra.mxu0 %v775
    %829 = vmatpush.bf16.msra.mxu0 %v773
    %830 = vmatpush.bf16.msra.mxu0 %v771
    %831 = vmatpush.bf16.msra.mxu0 %v769
    %832 = vmatpush.bf16.msra.mxu0 %v767
    %833 = vmatpush.bf16.msra.mxu0 %v765
    %834 = vmatpush.bf16.msra.mxu0 %v763
    %835 = vmatmul.bf16.gmra.mxu0 %v111
    %v836 = vpop.f32.mrf.mxu0
    %v837 = vadd.f32 %v663, %v836
    %v838 = vpop.f32.mrf.mxu0
    %v839 = vadd.f32 %v663, %v838
    %840 = vdwg.mxu0
    %841 = vmatpush.bf16.msra.mxu0 %v793
    %842 = vmatpush.bf16.msra.mxu0 %v791
    %843 = vmatpush.bf16.msra.mxu0 %v789
    %844 = vmatpush.bf16.msra.mxu0 %v787
    %845 = vmatpush.bf16.msra.mxu0 %v785
    %846 = vmatpush.bf16.msra.mxu0 %v783
    %847 = vmatpush.bf16.msra.mxu0 %v781
    %848 = vmatpush.bf16.msra.mxu0 %v779
    %849 = vmatmul.bf16.gmra.mxu0 %v112
    %v850 = vpop.f32.mrf.mxu0
    %v851 = vadd.f32 %v837, %v850
    %v852 = vpop.f32.mrf.mxu0
    %v853 = vadd.f32 %v839, %v852
    %854 = vdwg.mxu0
    %855 = vmatpush.bf16.msra.mxu0 %v778
    %856 = vmatpush.bf16.msra.mxu0 %v776
    %857 = vmatpush.bf16.msra.mxu0 %v774
    %858 = vmatpush.bf16.msra.mxu0 %v772
    %859 = vmatpush.bf16.msra.mxu0 %v770
    %860 = vmatpush.bf16.msra.mxu0 %v768
    %861 = vmatpush.bf16.msra.mxu0 %v766
    %862 = vmatpush.bf16.msra.mxu0 %v764
    %863 = vmatmul.bf16.gmra.mxu0 %v111
    %v864 = vpop.f32.mrf.mxu0
    %v865 = vadd.f32 %v664, %v864
    %v866 = vpop.f32.mrf.mxu0
    %v867 = vadd.f32 %v664, %v866
    %868 = vdwg.mxu0
    %869 = vmatpush.bf16.msra.mxu0 %v794
    %870 = vmatpush.bf16.msra.mxu0 %v792
    %871 = vmatpush.bf16.msra.mxu0 %v790
    %872 = vmatpush.bf16.msra.mxu0 %v788
    %873 = vmatpush.bf16.msra.mxu0 %v786
    %874 = vmatpush.bf16.msra.mxu0 %v784
    %875 = vmatpush.bf16.msra.mxu0 %v782
    %876 = vmatpush.bf16.msra.mxu0 %v780
    %877 = vmatmul.bf16.gmra.mxu0 %v112
    %v878 = vpop.f32.mrf.mxu0
    %v879 = vadd.f32 %v865, %v878
    %v880 = vpop.f32.mrf.mxu0
    %v881 = vadd.f32 %v867, %v880
    %882 = vdwg.mxu0
    %v883 = vpack.c.bf16 %v879, %v851
    %v884 = vpack.c.bf16 %v881, %v853
    %885 = vst [vmem:[#allocation14] sm:$0xff] %v883
    %886 = vst [vmem:[#allocation14 + $0x8] sm:$0xff] %v884
    // Predicated region
    $region50: #{tpu_custom_call.1} parent=1 // pred_check
      _
    $region51: #{tpu_custom_call.1} parent=1 // pred_check_branch
      %888 = sbr.rel (0) target = $region53
    $region52: #{tpu_custom_call.1} parent=1 // pred_region
      %890 = vsyncadd [#allocation4], 0
      %s891 = sshll.u32 [#allocation11], 4
      %s892 = int_to_ptr.vmem [resolvable:$true] %s891
      %s893 = sshll.u32 %s7, 4
      %s894 = int_to_ptr.hbm [resolvable:$true] %s893
      %899 = dma.vmem_to_hbm [thread:$0]  %s892, 256, %s894, [#allocation4], 128, 128, 8
    $region53: #{tpu_custom_call.1} parent=1 // pred_fallthru
      _
    // Predicated region
    $region54: #{tpu_custom_call.1} parent=1 // pred_check
      _
    $region55: #{tpu_custom_call.1} parent=1 // pred_check_branch
      %901 = sbr.rel (0) target = $region57
    $region56: #{tpu_custom_call.1} parent=1 // pred_region
      %903 = vsyncadd [#allocation13], 0
      %s904 = sshll.u32 [#allocation12], 4
      %s905 = int_to_ptr.vmem [resolvable:$true] %s904
      %s906 = sshll.u32 %s8, 4
      %s907 = int_to_ptr.hbm [resolvable:$true] %s906
      %912 = dma.vmem_to_hbm [thread:$0]  %s905, 256, %s907, [#allocation13], 128, 128, 8
    $region57: #{tpu_custom_call.1} parent=1 // pred_fallthru
      _
    // Predicated region
    $region58: #{tpu_custom_call.1} parent=1 // pred_check
      _
    $region59: #{tpu_custom_call.1} parent=1 // pred_check_branch
      %914 = sbr.rel (0) target = $region61
    $region60: #{tpu_custom_call.1} parent=1 // pred_region
      %916 = vsyncadd [#allocation13], 0
      %s917 = sshll.u32 [#allocation14], 4
      %s918 = int_to_ptr.vmem [resolvable:$true] %s917
      %s919 = sshll.u32 %s9, 4
      %s920 = int_to_ptr.hbm [resolvable:$true] %s919
      %925 = dma.vmem_to_hbm [thread:$0]  %s918, 256, %s920, [#allocation13], 128, 128, 8
    $region61: #{tpu_custom_call.1} parent=1 // pred_fallthru
      _
    // Predicated region
    $region62: #{tpu_custom_call.1} parent=1 // pred_check
      _
    $region63: #{tpu_custom_call.1} parent=1 // pred_check_branch
      %927 = sbr.rel (0) target = $region65
    $region64: #{tpu_custom_call.1} parent=1 // pred_region
      %929 = dma.done [#allocation4], 256
    $region65: #{tpu_custom_call.1} parent=1 // pred_fallthru
      _
    // Predicated region
    $region66: #{tpu_custom_call.1} parent=1 // pred_check
      _
    $region67: #{tpu_custom_call.1} parent=1 // pred_check_branch
      %931 = sbr.rel (0) target = $region69
    $region68: #{tpu_custom_call.1} parent=1 // pred_region
      %933 = dma.done [#allocation13], 256
    $region69: #{tpu_custom_call.1} parent=1 // pred_fallthru
      _
    // Predicated region
    $region70: #{tpu_custom_call.1} parent=1 // pred_check
      _
    $region71: #{tpu_custom_call.1} parent=1 // pred_check_branch
      %935 = sbr.rel (0) target = $region73
    $region72: #{tpu_custom_call.1} parent=1 // pred_region
      %937 = dma.done [#allocation13], 256
    $region73: #{tpu_custom_call.1} parent=1 // pred_fallthru
      _
    %938 = vsyncpa [#allocation3], 1
    %939 = vsyncpa [#allocation6], 1
    %940 = vsyncpa [#allocation9], 1
    %941 = vsyncpa [#allocation4], 1
    %942 = vsyncpa [#allocation13], 1

</llo_original>
